<compile_context>
chip_gen: v5e
topology: v5e:2x2
jax: 0.10.0
libtpu: 0.0.40
codegen_flags: <defaults>
</compile_context>

<pallas_src>
import functools

import numpy as np

import jax
import jax.numpy as jnp
from jax.experimental import pallas as pl
from jax.experimental.pallas import tpu as pltpu

_LANES = 128          # edges packed per row of the lane-dense views
_EPS = 1e-30          # floor for f so log() stays finite; p>=2 -> exp underflows to 0


def _radial_expansion_kernel(r_ref, expand_ref, pow_ref, o_ref, *, inv_cutoff_x2):
    # r_ref:      (TQ, 128)      f32  — 128 edges per packed row (lane-dense)
    # expand_ref: (128, 128*F)   bf16 — exact 0/1 lane-expansion matrix
    # pow_ref:    (1,   128*F)   f32  — clamp(exponents, 2) tiled 128x
    # o_ref:      (TQ, 128*F)    f32/bf16 — packed view of the (TQ*128, F) output
    r = r_ref[...]
    # f = clamp(2*(1 - r/cutoff), min=0), strength-reduced; EPS keeps log finite.
    # Since p >= 2, exp(p*log(EPS)) underflows to exactly 0 == the clamp-to-0 ref.
    f = jnp.maximum(2.0 - r * inv_cutoff_x2, _EPS)
    lf = jnp.log(f)                                   # one log per edge, lane-dense

    # Broadcast each edge's log(f) to its F consecutive output lanes via an
    # exact 0/1 matmul on the otherwise-idle MXU.  A two-term hi/lo bf16 split
    # keeps ~16 mantissa bits of log(f) (ample after exp with p <= 8) using
    # only 2 DEFAULT-precision MXU passes (vs ~6 for f32 HIGHEST) — this keeps
    # the MXU below the HBM-write time even on v5e at large tiles.
    lf_hi = lf.astype(jnp.bfloat16)
    lf_lo = (lf - lf_hi.astype(jnp.float32)).astype(jnp.bfloat16)
    e = expand_ref[...]
    lf_wide = (jnp.dot(lf_hi, e, preferred_element_type=jnp.float32) +
               jnp.dot(lf_lo, e, preferred_element_type=jnp.float32))

    o_ref[...] = jnp.exp(lf_wide * pow_ref[...]).astype(o_ref.dtype)


@functools.lru_cache(maxsize=None)
def _lane_expand_matrix(features: int) -> jax.Array:
    """Cached (128, 128*F) bf16 0/1 matrix: output lane c pulls edge lane c // F."""
    out_lanes = _LANES * features
    col = np.arange(out_lanes, dtype=np.int64) // features
    mat = (np.arange(_LANES, dtype=np.int64)[:, None] == col[None, :])
    return jnp.asarray(mat.astype(np.float32), dtype=jnp.bfloat16)


def _choose_row_block(rows: int, block_rows: int) -> int:
    """Sublane-aligned (multiple-of-8) row block.

    Prefers an even number of grid steps (>= 2) so v7x's two TensorCores stay
    balanced, while keeping each step's f32 output tile >= 256 KiB so the
    ~0.35 us per-step overhead stays amortized.
    """
    rows8 = ((rows + 7) // 8) * 8
    block_rows = max(8, (block_rows // 8) * 8)
    if rows8 <= block_rows:
        if rows8 >= 128:                       # split in two only if halves are big
            return ((rows8 + 15) // 16) * 8    # ceil(rows8/2) rounded up to 8
        return rows8
    steps = -(-rows8 // block_rows)
    if steps % 2:
        steps += 1                             # even step count -> balanced cores
    tq = -(-rows8 // steps)
    return ((tq + 7) // 8) * 8


def radial_expansion(r: jax.Array,
                     exponents: jax.Array,
                     cutoff: float = 5.0,
                     block_rows: int = 512,
                     out_dtype=jnp.float32) -> jax.Array:
    """Pallas implementation of RadialExpansion.forward.

    r: any shape, float32. Returns (r.size, features) in `out_dtype`
    (float32 by default, matching the PyTorch module; bf16 halves the
    dominant HBM write if the consumer tolerates it).
    block_rows=512 -> up to 65536 edges / grid step (512x1024 f32 tile = 2 MiB;
    ~5 MiB total VMEM with double-buffering, well inside the 32 MiB default
    scoped VMEM on v5e/v6e/v7x).
    """
    features = int(exponents.shape[0])
    assert _LANES % features == 0, "lane-dense packing requires features | 128"
    out_lanes = _LANES * features

    r_flat = r.reshape(-1).astype(jnp.float32)
    n = int(r_flat.shape[0])
    if n == 0:
        return jnp.zeros((0, features), out_dtype)

    # Packed-row geometry: 128 edges per row, sublane-aligned row blocks.
    rows = -(-n // _LANES)
    tq = _choose_row_block(rows, block_rows)
    grid0 = -(-rows // tq)
    n_rows = grid0 * tq
    n_pad = n_rows * _LANES
    if n_pad != n:
        r_flat = jnp.pad(r_flat, (0, n_pad - n))
    r_packed = r_flat.reshape(n_rows, _LANES)        # free metadata reshape

    # Hoisted constants: cached bf16 0/1 expansion matrix + tiled exponent row.
    expand = _lane_expand_matrix(features)                               # (128, 128*F)
    p_row = jnp.tile(jnp.maximum(exponents.astype(jnp.float32), 2.0),
                     _LANES).reshape(1, out_lanes)                       # (1, 128*F)

    out_itemsize = jnp.dtype(out_dtype).itemsize
    cost = pl.CostEstimate(
        flops=4 * n_pad * out_lanes,                      # 2 lane-broadcast matmuls
        transcendentals=n_pad * (1 + features),           # 1 log/edge + 1 exp/output
        bytes_accessed=(n_pad * 4 + n_rows * out_lanes * out_itemsize
                        + expand.size * 2 + out_lanes * 4),
    )

    out_packed = pl.pallas_call(
        functools.partial(_radial_expansion_kernel,
                          inv_cutoff_x2=2.0 / float(cutoff)),
        out_shape=jax.ShapeDtypeStruct((n_rows, out_lanes), out_dtype),
        grid_spec=pltpu.PrefetchScalarGridSpec(
            num_scalar_prefetch=0,
            grid=(grid0,),
            in_specs=[
                pl.BlockSpec((tq, _LANES), lambda i: (i, 0)),          # r (packed)
                pl.BlockSpec((_LANES, out_lanes), lambda i: (0, 0)),   # expand mat
                pl.BlockSpec((1, out_lanes), lambda i: (0, 0)),        # exponents
            ],
            out_specs=pl.BlockSpec((tq, out_lanes), lambda i: (i, 0)),
        ),
        compiler_params=pltpu.CompilerParams(
            dimension_semantics=("parallel",)),
        cost_estimate=cost,
    )(r_packed, expand, p_row)

    # (n_rows, 128*F) row-major is byte-identical to (n_pad, F): free reshape.
    out = out_packed.reshape(n_pad, features)
    if n_pad == n:
        return out
    # TODO(synk): if the consumer can accept the padded array, return (out, n)
    # instead so this slice fuses away rather than re-touching the output.
    return out[:n]


def make_exponents(features: int = 8, max_power: float = 8.0) -> jax.Array:
    """Deterministic parameter init mirroring RadialExpansion.__init__."""
    beta = (max_power / 2.0) ** (1.0 / (features - 1))
    return jnp.asarray([2.0 * beta ** i for i in range(features)],
                       dtype=jnp.float32)


def radial_expansion_ref(r, exponents, cutoff=5.0):
    """Pure-JAX reference faithful to the PyTorch forward."""
    f = jnp.maximum(2.0 * (1.0 - r.reshape(-1, 1) / cutoff), 0.0)
    f = jnp.broadcast_to(f, (f.shape[0], exponents.shape[0]))
    return f ** jnp.maximum(exponents, 2.0)


if __name__ == "__main__":
    key = jax.random.PRNGKey(0)
    cutoff = 5.0
    features = 8
    max_power = 8.0
    exponents = make_exponents(features, max_power)

    # Two sizes: a tiny one (single block, heavy padding path) and a larger one
    # that exercises a multi-step, core-balanced parallel grid.
    for idx, n_edges in enumerate((100, 20000)):
        k = jax.random.fold_in(key, idx)
        # distances in [0, 6]: some beyond cutoff -> clamped to 0.
        r = jax.random.uniform(k, (n_edges,), dtype=jnp.float32,
                               minval=0.0, maxval=6.0)

        out = jax.block_until_ready(
            radial_expansion(r, exponents, cutoff=cutoff))
        ref = radial_expansion_ref(r, exponents, cutoff=cutoff)

        assert out.shape == (n_edges, features), out.shape
        assert out.dtype == jnp.float32
        assert jnp.allclose(out, ref, rtol=1e-4, atol=1e-6), \
            float(jnp.max(jnp.abs(out - ref)))

    # bf16-output fast path (halves the dominant HBM write); looser tolerance.
    r = jax.random.uniform(jax.random.fold_in(key, 7), (20000,),
                           dtype=jnp.float32, minval=0.0, maxval=6.0)
    out16 = jax.block_until_ready(
        radial_expansion(r, exponents, cutoff=cutoff, out_dtype=jnp.bfloat16))
    ref = radial_expansion_ref(r, exponents, cutoff=cutoff)
    assert out16.dtype == jnp.bfloat16
    assert jnp.allclose(out16.astype(jnp.float32), ref, rtol=2e-2, atol=1e-2)

    print("KERNEL_OK")
</pallas_src>

<mosaic_0001>
module attributes {stable_mosaic.version = 11 : i64} {
  func.func @_radial_expansion_kernel(%arg0: i32, %arg1: memref<8x128xf32, #tpu.memory_space<vmem>>, %arg2: memref<128x1024xbf16, #tpu.memory_space<vmem>>, %arg3: memref<1x1024xf32, #tpu.memory_space<vmem>>, %arg4: memref<8x1024xf32, #tpu.memory_space<vmem>>) attributes {dimension_semantics = [#tpu.dimension_semantics<parallel>], iteration_bounds = array<i64: 1>, scalar_prefetch = 0 : i64, scratch_operands = 0 : i64, tpu.core_type = #tpu.core_type<tc>, window_params = [{transform_indices = @transform_0, window_bounds = array<i64: 8, 128>}, {pipeline_mode = #tpu.pipeline_mode<synchronous>, transform_indices = @transform_1, window_bounds = array<i64: 128, 1024>}, {pipeline_mode = #tpu.pipeline_mode<synchronous>, transform_indices = @transform_2, window_bounds = array<i64: 1, 1024>}, {transform_indices = @transform_3, window_bounds = array<i64: 8, 1024>}]} {
    %c0 = arith.constant 0 : index
    %c0_0 = arith.constant 0 : index
    %0 = vector.load %arg1[%c0, %c0_0] : memref<8x128xf32, #tpu.memory_space<vmem>>, vector<8x128xf32>
    %cst = arith.constant 4.000000e-01 : f32
    %1 = vector.broadcast %cst : f32 to vector<8x128xf32>
    %2 = arith.mulf %0, %1 : vector<8x128xf32>
    %cst_1 = arith.constant 2.000000e+00 : f32
    %3 = vector.broadcast %cst_1 : f32 to vector<8x128xf32>
    %4 = arith.subf %3, %2 : vector<8x128xf32>
    %cst_2 = arith.constant 1.000000e-30 : f32
    %5 = vector.broadcast %cst_2 : f32 to vector<8x128xf32>
    %6 = arith.maximumf %4, %5 : vector<8x128xf32>
    %7 = math.log %6 : vector<8x128xf32>
    %8 = arith.truncf %7 : vector<8x128xf32> to vector<8x128xbf16>
    %9 = arith.extf %8 : vector<8x128xbf16> to vector<8x128xf32>
    %10 = arith.subf %7, %9 : vector<8x128xf32>
    %11 = arith.truncf %10 : vector<8x128xf32> to vector<8x128xbf16>
    %c0_3 = arith.constant 0 : index
    %c0_4 = arith.constant 0 : index
    %12 = vector.load %arg2[%c0_3, %c0_4] : memref<128x1024xbf16, #tpu.memory_space<vmem>>, vector<128x1024xbf16>
    %cst_5 = arith.constant dense<0.000000e+00> : vector<8x1024xf32>
    %13 = tpu.matmul %8, %12, %cst_5 {dimension_numbers = #tpu.dot_dimension_numbers<[1], [0], [0], [1], [0, 0, 1, 1], [], []>} : vector<8x128xbf16>, vector<128x1024xbf16>, vector<8x1024xf32> -> vector<8x1024xf32>
    %cst_6 = arith.constant dense<0.000000e+00> : vector<8x1024xf32>
    %14 = tpu.matmul %11, %12, %cst_6 {dimension_numbers = #tpu.dot_dimension_numbers<[1], [0], [0], [1], [0, 0, 1, 1], [], []>} : vector<8x128xbf16>, vector<128x1024xbf16>, vector<8x1024xf32> -> vector<8x1024xf32>
    %15 = arith.addf %13, %14 : vector<8x1024xf32>
    %c0_7 = arith.constant 0 : index
    %c0_8 = arith.constant 0 : index
    %16 = vector.load %arg3[%c0_7, %c0_8] : memref<1x1024xf32, #tpu.memory_space<vmem>>, vector<1x1024xf32>
    %17 = vector.broadcast %16 : vector<1x1024xf32> to vector<8x1024xf32>
    %18 = arith.mulf %15, %17 : vector<8x1024xf32>
    %19 = math.exp %18 : vector<8x1024xf32>
    %c0_9 = arith.constant 0 : index
    %c0_10 = arith.constant 0 : index
    %20 = vector.load %arg4[%c0_9, %c0_10] : memref<8x1024xf32, #tpu.memory_space<vmem>>, vector<8x1024xf32>
    tpu.vector_store %arg4[%c0_9, %c0_10], %19 {strides = array<i32>} : memref<8x1024xf32, #tpu.memory_space<vmem>>, vector<8x1024xf32>,
    return
  }
  func.func @transform_0(%arg0: i32) -> (i32, i32) {
    %c0_i32 = arith.constant 0 : i32
    %c0_i32_0 = arith.constant 0 : i32
    return %arg0, %c0_i32 : i32, i32
  }
  func.func @transform_1(%arg0: i32) -> (i32, i32) {
    %c0_i32 = arith.constant 0 : i32
    %c0_i32_0 = arith.constant 0 : i32
    %c0_i32_1 = arith.constant 0 : i32
    return %c0_i32, %c0_i32_0 : i32, i32
  }
  func.func @transform_2(%arg0: i32) -> (i32, i32) {
    %c0_i32 = arith.constant 0 : i32
    %c0_i32_0 = arith.constant 0 : i32
    %c0_i32_1 = arith.constant 0 : i32
    return %c0_i32, %c0_i32_0 : i32, i32
  }
  func.func @transform_3(%arg0: i32) -> (i32, i32) {
    %c0_i32 = arith.constant 0 : i32
    %c0_i32_0 = arith.constant 0 : i32
    return %arg0, %c0_i32 : i32, i32
  }
}

</mosaic_0001>

<llo_original>
// kernel: tpu_custom_call.1
$region0: #{tpu_custom_call.1}
  #allocation0 [shape = 'u32[]', space=smem, size = 0x4, offset = 0x4, fixed_abs, tag = 'smem constant byte address 0x4 - core index']
  #allocation1 [shape = 'u32[72,128]{1,0:T(1,128)}', space=vmem, size = 0x9000, scoped, tag = 'internal scratch']
  %s0 = inlined_call_operand.hbm [shape: f32[8,128], index: 0, kind: input, shape index: {}]
  %s1 = inlined_call_operand.hbm [shape: bf16[128,1024], index: 1, kind: input, shape index: {}]
  %s2 = inlined_call_operand.hbm [shape: f32[1,1024], index: 2, kind: input, shape index: {}]
  %s3 = inlined_call_operand.hbm [shape: f32[8,1024], index: 3, kind: output, shape index: {}]
  %s4 = sld [smem:[#allocation0]]
  $region34: #{tpu_custom_call.1} parent=0
    _
  %s6 = ssub.s32 1, %s4
  %s7 = scalar_select 0, %s6, %s4
  $region1: #{tpu_custom_call.1} parent=0
    #allocation2 [shape = 'u8[4096]{0}', space=vmem, size = 0x1000, scoped, tag = 'input window, operand 0, single buffered']
    #allocation3 [shape = 's32[1]{0}', space=sflag, size = 0x4, scoped, tag = 'scoped memory for tpu_custom_call.1']
    #allocation4 [shape = 's32[1]{0}', space=sflag, size = 0x4, scoped, tag = 'scoped memory for tpu_custom_call.1']
    #allocation5 [shape = 'u8[262144]{0}', space=vmem, size = 0x40000, scoped, tag = 'input window, operand 1, single buffered']
    #allocation6 [shape = 's32[1]{0}', space=sflag, size = 0x4, scoped, tag = 'scoped memory for tpu_custom_call.1']
    #allocation7 [shape = 'u8[4096]{0}', space=vmem, size = 0x1000, scoped, tag = 'input window, operand 2, single buffered']
    #allocation8 [shape = 'u8[32768]{0}', space=vmem, size = 0x8000, scoped, tag = 'output window, operand 0, single buffered']
    %8 = vsyncpa [#allocation3], 0
    %9 = vsyncpa [#allocation6], 0
    %10 = vsyncpa [#allocation4], 0
    // Predicated region
    $region2: #{tpu_custom_call.1} parent=1 // pred_check
      _
    $region3: #{tpu_custom_call.1} parent=1 // pred_check_branch
      %12 = sbr.rel (0) target = $region5
    $region4: #{tpu_custom_call.1} parent=1 // pred_region
      %14 = vsyncadd [#allocation3], 0
      %s16 = sshll.u32 %s0, 4
      %s17 = int_to_ptr.hbm [resolvable:$true] %s16
      %s18 = sshll.u32 [#allocation2], 4
      %s19 = int_to_ptr.vmem [resolvable:$true] %s18
      %21 = dma.hbm_to_vmem [thread:$0]  %s17, 128, %s19, [#allocation3]
    $region5: #{tpu_custom_call.1} parent=1 // pred_fallthru
      _
    // Predicated region
    $region6: #{tpu_custom_call.1} parent=1 // pred_check
      _
    $region7: #{tpu_custom_call.1} parent=1 // pred_check_branch
      %23 = sbr.rel (0) target = $region9
    $region8: #{tpu_custom_call.1} parent=1 // pred_region
      %25 = vsyncadd [#allocation6], 0
      %s26 = sshll.u32 %s1, 4
      %s27 = int_to_ptr.hbm [resolvable:$true] %s26
      %s28 = sshll.u32 [#allocation5], 4
      %s29 = int_to_ptr.vmem [resolvable:$true] %s28
      %34 = dma.hbm_to_vmem [thread:$0]  %s27, 8192, %s29, [#allocation6], 512, 512, 32
    $region9: #{tpu_custom_call.1} parent=1 // pred_fallthru
      _
    // Predicated region
    $region10: #{tpu_custom_call.1} parent=1 // pred_check
      _
    $region11: #{tpu_custom_call.1} parent=1 // pred_check_branch
      %36 = sbr.rel (0) target = $region13
    $region12: #{tpu_custom_call.1} parent=1 // pred_region
      %38 = vsyncadd [#allocation6], 0
      %s40 = sshll.u32 %s2, 4
      %s41 = int_to_ptr.hbm [resolvable:$true] %s40
      %s42 = sshll.u32 [#allocation7], 4
      %s43 = int_to_ptr.vmem [resolvable:$true] %s42
      %45 = dma.hbm_to_vmem [thread:$0]  %s41, 128, %s43, [#allocation6]
    $region13: #{tpu_custom_call.1} parent=1 // pred_fallthru
      _
    // Predicated region
    $region14: #{tpu_custom_call.1} parent=1 // pred_check
      _
    $region15: #{tpu_custom_call.1} parent=1 // pred_check_branch
      %47 = sbr.rel (0) target = $region17
    $region16: #{tpu_custom_call.1} parent=1 // pred_region
      %49 = dma.done [#allocation3], 128
    $region17: #{tpu_custom_call.1} parent=1 // pred_fallthru
      _
    // Predicated region
    $region18: #{tpu_custom_call.1} parent=1 // pred_check
      _
    $region19: #{tpu_custom_call.1} parent=1 // pred_check_branch
      %51 = sbr.rel (0) target = $region21
    $region20: #{tpu_custom_call.1} parent=1 // pred_region
      %53 = dma.done [#allocation6], 8192
    $region21: #{tpu_custom_call.1} parent=1 // pred_fallthru
      _
    // Predicated region
    $region22: #{tpu_custom_call.1} parent=1 // pred_check
      _
    $region23: #{tpu_custom_call.1} parent=1 // pred_check_branch
      %55 = sbr.rel (0) target = $region25
    $region24: #{tpu_custom_call.1} parent=1 // pred_region
      %57 = dma.done [#allocation6], 128
    $region25: #{tpu_custom_call.1} parent=1 // pred_fallthru
      _
    %v58 = vld [vmem:[#allocation2] sm:$0xff]
    %v59 = vmul.f32 %v58, 0.4
    %v60 = vsub.f32 2.0, %v59
    %v61 = vmax.f32 %v60, 1e-30
    %v62 = vlog2.pop %v61
    %v63 = vmul.f32 %v62, 0.6931472
    %v64 = vpack.c.bf16 %v63, %v63
    %v65 = vunpack.c.l.bf16 %v64
    %v66 = vsub.f32 %v63, %v65
    %v67 = vpack.c.bf16 %v66, %v66
    %v68 = vld [vmem:[#allocation5] sm:$0xff]
    %v69 = vld [vmem:[#allocation5 + $0x8] sm:$0xff]
    %v70 = vld [vmem:[#allocation5 + $0x10] sm:$0xff]
    %v71 = vld [vmem:[#allocation5 + $0x18] sm:$0xff]
    %v72 = vld [vmem:[#allocation5 + $0x20] sm:$0xff]
    %v73 = vld [vmem:[#allocation5 + $0x28] sm:$0xff]
    %v74 = vld [vmem:[#allocation5 + $0x30] sm:$0xff]
    %v75 = vld [vmem:[#allocation5 + $0x38] sm:$0xff]
    %v76 = vld [vmem:[#allocation5 + $0x40] sm:$0xff]
    %v77 = vld [vmem:[#allocation5 + $0x48] sm:$0xff]
    %v78 = vld [vmem:[#allocation5 + $0x50] sm:$0xff]
    %v79 = vld [vmem:[#allocation5 + $0x58] sm:$0xff]
    %v80 = vld [vmem:[#allocation5 + $0x60] sm:$0xff]
    %v81 = vld [vmem:[#allocation5 + $0x68] sm:$0xff]
    %v82 = vld [vmem:[#allocation5 + $0x70] sm:$0xff]
    %v83 = vld [vmem:[#allocation5 + $0x78] sm:$0xff]
    %v84 = vld [vmem:[#allocation5 + $0x80] sm:$0xff]
    %v85 = vld [vmem:[#allocation5 + $0x88] sm:$0xff]
    %v86 = vld [vmem:[#allocation5 + $0x90] sm:$0xff]
    %v87 = vld [vmem:[#allocation5 + $0x98] sm:$0xff]
    %v88 = vld [vmem:[#allocation5 + $0xa0] sm:$0xff]
    %v89 = vld [vmem:[#allocation5 + $0xa8] sm:$0xff]
    %v90 = vld [vmem:[#allocation5 + $0xb0] sm:$0xff]
    %v91 = vld [vmem:[#allocation5 + $0xb8] sm:$0xff]
    %v92 = vld [vmem:[#allocation5 + $0xc0] sm:$0xff]
    %v93 = vld [vmem:[#allocation5 + $0xc8] sm:$0xff]
    %v94 = vld [vmem:[#allocation5 + $0xd0] sm:$0xff]
    %v95 = vld [vmem:[#allocation5 + $0xd8] sm:$0xff]
    %v96 = vld [vmem:[#allocation5 + $0xe0] sm:$0xff]
    %v97 = vld [vmem:[#allocation5 + $0xe8] sm:$0xff]
    %v98 = vld [vmem:[#allocation5 + $0xf0] sm:$0xff]
    %v99 = vld [vmem:[#allocation5 + $0xf8] sm:$0xff]
    %v100 = vld [vmem:[#allocation5 + $0x100] sm:$0xff]
    %v101 = vld [vmem:[#allocation5 + $0x108] sm:$0xff]
    %v102 = vld [vmem:[#allocation5 + $0x110] sm:$0xff]
    %v103 = vld [vmem:[#allocation5 + $0x118] sm:$0xff]
    %v104 = vld [vmem:[#allocation5 + $0x120] sm:$0xff]
    %v105 = vld [vmem:[#allocation5 + $0x128] sm:$0xff]
    %v106 = vld [vmem:[#allocation5 + $0x130] sm:$0xff]
    %v107 = vld [vmem:[#allocation5 + $0x138] sm:$0xff]
    %v108 = vld [vmem:[#allocation5 + $0x140] sm:$0xff]
    %v109 = vld [vmem:[#allocation5 + $0x148] sm:$0xff]
    %v110 = vld [vmem:[#allocation5 + $0x150] sm:$0xff]
    %v111 = vld [vmem:[#allocation5 + $0x158] sm:$0xff]
    %v112 = vld [vmem:[#allocation5 + $0x160] sm:$0xff]
    %v113 = vld [vmem:[#allocation5 + $0x168] sm:$0xff]
    %v114 = vld [vmem:[#allocation5 + $0x170] sm:$0xff]
    %v115 = vld [vmem:[#allocation5 + $0x178] sm:$0xff]
    %v116 = vld [vmem:[#allocation5 + $0x180] sm:$0xff]
    %v117 = vld [vmem:[#allocation5 + $0x188] sm:$0xff]
    %v118 = vld [vmem:[#allocation5 + $0x190] sm:$0xff]
    %v119 = vld [vmem:[#allocation5 + $0x198] sm:$0xff]
    %v120 = vld [vmem:[#allocation5 + $0x1a0] sm:$0xff]
    %v121 = vld [vmem:[#allocation5 + $0x1a8] sm:$0xff]
    %v122 = vld [vmem:[#allocation5 + $0x1b0] sm:$0xff]
    %v123 = vld [vmem:[#allocation5 + $0x1b8] sm:$0xff]
    %v124 = vld [vmem:[#allocation5 + $0x1c0] sm:$0xff]
    %v125 = vld [vmem:[#allocation5 + $0x1c8] sm:$0xff]
    %v126 = vld [vmem:[#allocation5 + $0x1d0] sm:$0xff]
    %v127 = vld [vmem:[#allocation5 + $0x1d8] sm:$0xff]
    %v128 = vld [vmem:[#allocation5 + $0x1e0] sm:$0xff]
    %v129 = vld [vmem:[#allocation5 + $0x1e8] sm:$0xff]
    %v130 = vld [vmem:[#allocation5 + $0x1f0] sm:$0xff]
    %v131 = vld [vmem:[#allocation5 + $0x1f8] sm:$0xff]
    %v196 = vunpack.c.l.b16 %v68
    %v197 = vunpack.c.h.b16 %v68
    %v198 = vunpack.c.l.b16 %v69
    %v199 = vunpack.c.h.b16 %v69
    %v200 = vunpack.c.l.b16 %v70
    %v201 = vunpack.c.h.b16 %v70
    %v202 = vunpack.c.l.b16 %v71
    %v203 = vunpack.c.h.b16 %v71
    %v204 = vunpack.c.l.b16 %v72
    %v205 = vunpack.c.h.b16 %v72
    %v206 = vunpack.c.l.b16 %v73
    %v207 = vunpack.c.h.b16 %v73
    %v208 = vunpack.c.l.b16 %v74
    %v209 = vunpack.c.h.b16 %v74
    %v210 = vunpack.c.l.b16 %v75
    %v211 = vunpack.c.h.b16 %v75
    %v212 = vunpack.c.l.b16 %v76
    %v213 = vunpack.c.h.b16 %v76
    %v214 = vunpack.c.l.b16 %v77
    %v215 = vunpack.c.h.b16 %v77
    %v216 = vunpack.c.l.b16 %v78
    %v217 = vunpack.c.h.b16 %v78
    %v218 = vunpack.c.l.b16 %v79
    %v219 = vunpack.c.h.b16 %v79
    %v220 = vunpack.c.l.b16 %v80
    %v221 = vunpack.c.h.b16 %v80
    %v222 = vunpack.c.l.b16 %v81
    %v223 = vunpack.c.h.b16 %v81
    %v224 = vunpack.c.l.b16 %v82
    %v225 = vunpack.c.h.b16 %v82
    %v226 = vunpack.c.l.b16 %v83
    %v227 = vunpack.c.h.b16 %v83
    %v228 = vunpack.c.l.b16 %v84
    %v229 = vunpack.c.h.b16 %v84
    %v230 = vunpack.c.l.b16 %v85
    %v231 = vunpack.c.h.b16 %v85
    %v232 = vunpack.c.l.b16 %v86
    %v233 = vunpack.c.h.b16 %v86
    %v234 = vunpack.c.l.b16 %v87
    %v235 = vunpack.c.h.b16 %v87
    %v236 = vunpack.c.l.b16 %v88
    %v237 = vunpack.c.h.b16 %v88
    %v238 = vunpack.c.l.b16 %v89
    %v239 = vunpack.c.h.b16 %v89
    %v240 = vunpack.c.l.b16 %v90
    %v241 = vunpack.c.h.b16 %v90
    %v242 = vunpack.c.l.b16 %v91
    %v243 = vunpack.c.h.b16 %v91
    %v244 = vunpack.c.l.b16 %v92
    %v245 = vunpack.c.h.b16 %v92
    %v246 = vunpack.c.l.b16 %v93
    %v247 = vunpack.c.h.b16 %v93
    %v248 = vunpack.c.l.b16 %v94
    %v249 = vunpack.c.h.b16 %v94
    %v250 = vunpack.c.l.b16 %v95
    %v251 = vunpack.c.h.b16 %v95
    %v252 = vunpack.c.l.b16 %v96
    %v253 = vunpack.c.h.b16 %v96
    %v254 = vunpack.c.l.b16 %v97
    %v255 = vunpack.c.h.b16 %v97
    %v256 = vunpack.c.l.b16 %v98
    %v257 = vunpack.c.h.b16 %v98
    %v258 = vunpack.c.l.b16 %v99
    %v259 = vunpack.c.h.b16 %v99
    %v260 = vunpack.c.l.b16 %v100
    %v261 = vunpack.c.h.b16 %v100
    %v262 = vunpack.c.l.b16 %v101
    %v263 = vunpack.c.h.b16 %v101
    %v264 = vunpack.c.l.b16 %v102
    %v265 = vunpack.c.h.b16 %v102
    %v266 = vunpack.c.l.b16 %v103
    %v267 = vunpack.c.h.b16 %v103
    %v268 = vunpack.c.l.b16 %v104
    %v269 = vunpack.c.h.b16 %v104
    %v270 = vunpack.c.l.b16 %v105
    %v271 = vunpack.c.h.b16 %v105
    %v272 = vunpack.c.l.b16 %v106
    %v273 = vunpack.c.h.b16 %v106
    %v274 = vunpack.c.l.b16 %v107
    %v275 = vunpack.c.h.b16 %v107
    %v276 = vunpack.c.l.b16 %v108
    %v277 = vunpack.c.h.b16 %v108
    %v278 = vunpack.c.l.b16 %v109
    %v279 = vunpack.c.h.b16 %v109
    %v280 = vunpack.c.l.b16 %v110
    %v281 = vunpack.c.h.b16 %v110
    %v282 = vunpack.c.l.b16 %v111
    %v283 = vunpack.c.h.b16 %v111
    %v284 = vunpack.c.l.b16 %v112
    %v285 = vunpack.c.h.b16 %v112
    %v286 = vunpack.c.l.b16 %v113
    %v287 = vunpack.c.h.b16 %v113
    %v288 = vunpack.c.l.b16 %v114
    %v289 = vunpack.c.h.b16 %v114
    %v290 = vunpack.c.l.b16 %v115
    %v291 = vunpack.c.h.b16 %v115
    %v292 = vunpack.c.l.b16 %v116
    %v293 = vunpack.c.h.b16 %v116
    %v294 = vunpack.c.l.b16 %v117
    %v295 = vunpack.c.h.b16 %v117
    %v296 = vunpack.c.l.b16 %v118
    %v297 = vunpack.c.h.b16 %v118
    %v298 = vunpack.c.l.b16 %v119
    %v299 = vunpack.c.h.b16 %v119
    %v300 = vunpack.c.l.b16 %v120
    %v301 = vunpack.c.h.b16 %v120
    %v302 = vunpack.c.l.b16 %v121
    %v303 = vunpack.c.h.b16 %v121
    %v304 = vunpack.c.l.b16 %v122
    %v305 = vunpack.c.h.b16 %v122
    %v306 = vunpack.c.l.b16 %v123
    %v307 = vunpack.c.h.b16 %v123
    %v308 = vunpack.c.l.b16 %v124
    %v309 = vunpack.c.h.b16 %v124
    %v310 = vunpack.c.l.b16 %v125
    %v311 = vunpack.c.h.b16 %v125
    %v312 = vunpack.c.l.b16 %v126
    %v313 = vunpack.c.h.b16 %v126
    %v314 = vunpack.c.l.b16 %v127
    %v315 = vunpack.c.h.b16 %v127
    %v316 = vunpack.c.l.b16 %v128
    %v317 = vunpack.c.h.b16 %v128
    %v318 = vunpack.c.l.b16 %v129
    %v319 = vunpack.c.h.b16 %v129
    %v320 = vunpack.c.l.b16 %v130
    %v321 = vunpack.c.h.b16 %v130
    %v322 = vunpack.c.l.b16 %v131
    %v323 = vunpack.c.h.b16 %v131
    %v324 = vpack.c.b16 %v204, %v196
    %v325 = vpack.c.b16 %v205, %v197
    %v326 = vpack.c.b16 %v206, %v198
    %v327 = vpack.c.b16 %v207, %v199
    %v328 = vpack.c.b16 %v208, %v200
    %v329 = vpack.c.b16 %v209, %v201
    %v330 = vpack.c.b16 %v210, %v202
    %v331 = vpack.c.b16 %v211, %v203
    %v332 = vpack.c.b16 %v220, %v212
    %v333 = vpack.c.b16 %v221, %v213
    %v334 = vpack.c.b16 %v222, %v214
    %v335 = vpack.c.b16 %v223, %v215
    %v336 = vpack.c.b16 %v224, %v216
    %v337 = vpack.c.b16 %v225, %v217
    %v338 = vpack.c.b16 %v226, %v218
    %v339 = vpack.c.b16 %v227, %v219
    %v340 = vpack.c.b16 %v236, %v228
    %v341 = vpack.c.b16 %v237, %v229
    %v342 = vpack.c.b16 %v238, %v230
    %v343 = vpack.c.b16 %v239, %v231
    %v344 = vpack.c.b16 %v240, %v232
    %v345 = vpack.c.b16 %v241, %v233
    %v346 = vpack.c.b16 %v242, %v234
    %v347 = vpack.c.b16 %v243, %v235
    %v348 = vpack.c.b16 %v252, %v244
    %v349 = vpack.c.b16 %v253, %v245
    %v350 = vpack.c.b16 %v254, %v246
    %v351 = vpack.c.b16 %v255, %v247
    %v352 = vpack.c.b16 %v256, %v248
    %v353 = vpack.c.b16 %v257, %v249
    %v354 = vpack.c.b16 %v258, %v250
    %v355 = vpack.c.b16 %v259, %v251
    %v356 = vpack.c.b16 %v268, %v260
    %v357 = vpack.c.b16 %v269, %v261
    %v358 = vpack.c.b16 %v270, %v262
    %v359 = vpack.c.b16 %v271, %v263
    %v360 = vpack.c.b16 %v272, %v264
    %v361 = vpack.c.b16 %v273, %v265
    %v362 = vpack.c.b16 %v274, %v266
    %v363 = vpack.c.b16 %v275, %v267
    %v364 = vpack.c.b16 %v284, %v276
    %v365 = vpack.c.b16 %v285, %v277
    %v366 = vpack.c.b16 %v286, %v278
    %v367 = vpack.c.b16 %v287, %v279
    %v368 = vpack.c.b16 %v288, %v280
    %v369 = vpack.c.b16 %v289, %v281
    %v370 = vpack.c.b16 %v290, %v282
    %v371 = vpack.c.b16 %v291, %v283
    %v372 = vpack.c.b16 %v300, %v292
    %v373 = vpack.c.b16 %v301, %v293
    %v374 = vpack.c.b16 %v302, %v294
    %v375 = vpack.c.b16 %v303, %v295
    %v376 = vpack.c.b16 %v304, %v296
    %v377 = vpack.c.b16 %v305, %v297
    %v378 = vpack.c.b16 %v306, %v298
    %v379 = vpack.c.b16 %v307, %v299
    %v380 = vpack.c.b16 %v316, %v308
    %v381 = vpack.c.b16 %v317, %v309
    %v382 = vpack.c.b16 %v318, %v310
    %v383 = vpack.c.b16 %v319, %v311
    %v384 = vpack.c.b16 %v320, %v312
    %v385 = vpack.c.b16 %v321, %v313
    %v386 = vpack.c.b16 %v322, %v314
    %v387 = vpack.c.b16 %v323, %v315
    %452 = vmatpush.bf16.msra.mxu0 %v380
    %453 = vmatpush.bf16.msra.mxu0 %v372
    %454 = vmatpush.bf16.msra.mxu0 %v364
    %455 = vmatpush.bf16.msra.mxu0 %v356
    %456 = vmatpush.bf16.msra.mxu0 %v348
    %457 = vmatpush.bf16.msra.mxu0 %v340
    %458 = vmatpush.bf16.msra.mxu0 %v332
    %459 = vmatpush.bf16.msra.mxu0 %v324
    %460 = vmatmul.bf16.gmra.mxu0 %v67
    %v461 = vpop.f32.mrf.mxu0
    %v462 = vadd.f32 0.0, %v461
    %v463 = vpop.f32.mrf.mxu0
    %464 = vdwg.mxu0
    %465 = vmatpush.bf16.msra.mxu0 %v381
    %466 = vmatpush.bf16.msra.mxu0 %v373
    %467 = vmatpush.bf16.msra.mxu0 %v365
    %468 = vmatpush.bf16.msra.mxu0 %v357
    %469 = vmatpush.bf16.msra.mxu0 %v349
    %470 = vmatpush.bf16.msra.mxu0 %v341
    %471 = vmatpush.bf16.msra.mxu0 %v333
    %472 = vmatpush.bf16.msra.mxu0 %v325
    %473 = vmatmul.bf16.gmra.mxu0 %v67
    %v474 = vpop.f32.mrf.mxu0
    %v475 = vadd.f32 0.0, %v474
    %v476 = vpop.f32.mrf.mxu0
    %477 = vdwg.mxu0
    %478 = vmatpush.bf16.msra.mxu0 %v382
    %479 = vmatpush.bf16.msra.mxu0 %v374
    %480 = vmatpush.bf16.msra.mxu0 %v366
    %481 = vmatpush.bf16.msra.mxu0 %v358
    %482 = vmatpush.bf16.msra.mxu0 %v350
    %483 = vmatpush.bf16.msra.mxu0 %v342
    %484 = vmatpush.bf16.msra.mxu0 %v334
    %485 = vmatpush.bf16.msra.mxu0 %v326
    %486 = vmatmul.bf16.gmra.mxu0 %v67
    %v487 = vpop.f32.mrf.mxu0
    %v488 = vadd.f32 0.0, %v487
    %v489 = vpop.f32.mrf.mxu0
    %490 = vdwg.mxu0
    %491 = vmatpush.bf16.msra.mxu0 %v383
    %492 = vmatpush.bf16.msra.mxu0 %v375
    %493 = vmatpush.bf16.msra.mxu0 %v367
    %494 = vmatpush.bf16.msra.mxu0 %v359
    %495 = vmatpush.bf16.msra.mxu0 %v351
    %496 = vmatpush.bf16.msra.mxu0 %v343
    %497 = vmatpush.bf16.msra.mxu0 %v335
    %498 = vmatpush.bf16.msra.mxu0 %v327
    %499 = vmatmul.bf16.gmra.mxu0 %v67
    %v500 = vpop.f32.mrf.mxu0
    %v501 = vadd.f32 0.0, %v500
    %v502 = vpop.f32.mrf.mxu0
    %503 = vdwg.mxu0
    %504 = vmatpush.bf16.msra.mxu0 %v384
    %505 = vmatpush.bf16.msra.mxu0 %v376
    %506 = vmatpush.bf16.msra.mxu0 %v368
    %507 = vmatpush.bf16.msra.mxu0 %v360
    %508 = vmatpush.bf16.msra.mxu0 %v352
    %509 = vmatpush.bf16.msra.mxu0 %v344
    %510 = vmatpush.bf16.msra.mxu0 %v336
    %511 = vmatpush.bf16.msra.mxu0 %v328
    %512 = vmatmul.bf16.gmra.mxu0 %v67
    %v513 = vpop.f32.mrf.mxu0
    %v514 = vadd.f32 0.0, %v513
    %v515 = vpop.f32.mrf.mxu0
    %516 = vdwg.mxu0
    %517 = vmatpush.bf16.msra.mxu0 %v385
    %518 = vmatpush.bf16.msra.mxu0 %v377
    %519 = vmatpush.bf16.msra.mxu0 %v369
    %520 = vmatpush.bf16.msra.mxu0 %v361
    %521 = vmatpush.bf16.msra.mxu0 %v353
    %522 = vmatpush.bf16.msra.mxu0 %v345
    %523 = vmatpush.bf16.msra.mxu0 %v337
    %524 = vmatpush.bf16.msra.mxu0 %v329
    %525 = vmatmul.bf16.gmra.mxu0 %v67
    %v526 = vpop.f32.mrf.mxu0
    %v527 = vadd.f32 0.0, %v526
    %v528 = vpop.f32.mrf.mxu0
    %529 = vdwg.mxu0
    %530 = vmatpush.bf16.msra.mxu0 %v386
    %531 = vmatpush.bf16.msra.mxu0 %v378
    %532 = vmatpush.bf16.msra.mxu0 %v370
    %533 = vmatpush.bf16.msra.mxu0 %v362
    %534 = vmatpush.bf16.msra.mxu0 %v354
    %535 = vmatpush.bf16.msra.mxu0 %v346
    %536 = vmatpush.bf16.msra.mxu0 %v338
    %537 = vmatpush.bf16.msra.mxu0 %v330
    %538 = vmatmul.bf16.gmra.mxu0 %v67
    %v539 = vpop.f32.mrf.mxu0
    %v540 = vadd.f32 0.0, %v539
    %v541 = vpop.f32.mrf.mxu0
    %542 = vdwg.mxu0
    %543 = vmatpush.bf16.msra.mxu0 %v387
    %544 = vmatpush.bf16.msra.mxu0 %v379
    %545 = vmatpush.bf16.msra.mxu0 %v371
    %546 = vmatpush.bf16.msra.mxu0 %v363
    %547 = vmatpush.bf16.msra.mxu0 %v355
    %548 = vmatpush.bf16.msra.mxu0 %v347
    %549 = vmatpush.bf16.msra.mxu0 %v339
    %550 = vmatpush.bf16.msra.mxu0 %v331
    %551 = vmatmul.bf16.gmra.mxu0 %v67
    %v552 = vpop.f32.mrf.mxu0
    %v553 = vadd.f32 0.0, %v552
    %v554 = vpop.f32.mrf.mxu0
    %555 = vdwg.mxu0
    %556 = vmatpush.bf16.msra.mxu0 %v380
    %557 = vmatpush.bf16.msra.mxu0 %v372
    %558 = vmatpush.bf16.msra.mxu0 %v364
    %559 = vmatpush.bf16.msra.mxu0 %v356
    %560 = vmatpush.bf16.msra.mxu0 %v348
    %561 = vmatpush.bf16.msra.mxu0 %v340
    %562 = vmatpush.bf16.msra.mxu0 %v332
    %563 = vmatpush.bf16.msra.mxu0 %v324
    %564 = vmatmul.bf16.gmra.mxu0 %v64
    %v565 = vpop.f32.mrf.mxu0
    %v566 = vadd.f32 %v462, %v565
    %v567 = vpop.f32.mrf.mxu0
    %568 = vdwg.mxu0
    %569 = vmatpush.bf16.msra.mxu0 %v381
    %570 = vmatpush.bf16.msra.mxu0 %v373
    %571 = vmatpush.bf16.msra.mxu0 %v365
    %572 = vmatpush.bf16.msra.mxu0 %v357
    %573 = vmatpush.bf16.msra.mxu0 %v349
    %574 = vmatpush.bf16.msra.mxu0 %v341
    %575 = vmatpush.bf16.msra.mxu0 %v333
    %576 = vmatpush.bf16.msra.mxu0 %v325
    %577 = vmatmul.bf16.gmra.mxu0 %v64
    %v578 = vpop.f32.mrf.mxu0
    %v579 = vadd.f32 %v475, %v578
    %v580 = vpop.f32.mrf.mxu0
    %581 = vdwg.mxu0
    %582 = vmatpush.bf16.msra.mxu0 %v382
    %583 = vmatpush.bf16.msra.mxu0 %v374
    %584 = vmatpush.bf16.msra.mxu0 %v366
    %585 = vmatpush.bf16.msra.mxu0 %v358
    %586 = vmatpush.bf16.msra.mxu0 %v350
    %587 = vmatpush.bf16.msra.mxu0 %v342
    %588 = vmatpush.bf16.msra.mxu0 %v334
    %589 = vmatpush.bf16.msra.mxu0 %v326
    %590 = vmatmul.bf16.gmra.mxu0 %v64
    %v591 = vpop.f32.mrf.mxu0
    %v592 = vadd.f32 %v488, %v591
    %v593 = vpop.f32.mrf.mxu0
    %594 = vdwg.mxu0
    %595 = vmatpush.bf16.msra.mxu0 %v383
    %596 = vmatpush.bf16.msra.mxu0 %v375
    %597 = vmatpush.bf16.msra.mxu0 %v367
    %598 = vmatpush.bf16.msra.mxu0 %v359
    %599 = vmatpush.bf16.msra.mxu0 %v351
    %600 = vmatpush.bf16.msra.mxu0 %v343
    %601 = vmatpush.bf16.msra.mxu0 %v335
    %602 = vmatpush.bf16.msra.mxu0 %v327
    %603 = vmatmul.bf16.gmra.mxu0 %v64
    %v604 = vpop.f32.mrf.mxu0
    %v605 = vadd.f32 %v501, %v604
    %v606 = vpop.f32.mrf.mxu0
    %607 = vdwg.mxu0
    %608 = vmatpush.bf16.msra.mxu0 %v384
    %609 = vmatpush.bf16.msra.mxu0 %v376
    %610 = vmatpush.bf16.msra.mxu0 %v368
    %611 = vmatpush.bf16.msra.mxu0 %v360
    %612 = vmatpush.bf16.msra.mxu0 %v352
    %613 = vmatpush.bf16.msra.mxu0 %v344
    %614 = vmatpush.bf16.msra.mxu0 %v336
    %615 = vmatpush.bf16.msra.mxu0 %v328
    %616 = vmatmul.bf16.gmra.mxu0 %v64
    %v617 = vpop.f32.mrf.mxu0
    %v618 = vadd.f32 %v514, %v617
    %v619 = vpop.f32.mrf.mxu0
    %620 = vdwg.mxu0
    %621 = vmatpush.bf16.msra.mxu0 %v385
    %622 = vmatpush.bf16.msra.mxu0 %v377
    %623 = vmatpush.bf16.msra.mxu0 %v369
    %624 = vmatpush.bf16.msra.mxu0 %v361
    %625 = vmatpush.bf16.msra.mxu0 %v353
    %626 = vmatpush.bf16.msra.mxu0 %v345
    %627 = vmatpush.bf16.msra.mxu0 %v337
    %628 = vmatpush.bf16.msra.mxu0 %v329
    %629 = vmatmul.bf16.gmra.mxu0 %v64
    %v630 = vpop.f32.mrf.mxu0
    %v631 = vadd.f32 %v527, %v630
    %v632 = vpop.f32.mrf.mxu0
    %633 = vdwg.mxu0
    %634 = vmatpush.bf16.msra.mxu0 %v386
    %635 = vmatpush.bf16.msra.mxu0 %v378
    %636 = vmatpush.bf16.msra.mxu0 %v370
    %637 = vmatpush.bf16.msra.mxu0 %v362
    %638 = vmatpush.bf16.msra.mxu0 %v354
    %639 = vmatpush.bf16.msra.mxu0 %v346
    %640 = vmatpush.bf16.msra.mxu0 %v338
    %641 = vmatpush.bf16.msra.mxu0 %v330
    %642 = vmatmul.bf16.gmra.mxu0 %v64
    %v643 = vpop.f32.mrf.mxu0
    %v644 = vadd.f32 %v540, %v643
    %v645 = vpop.f32.mrf.mxu0
    %646 = vdwg.mxu0
    %647 = vmatpush.bf16.msra.mxu0 %v387
    %648 = vmatpush.bf16.msra.mxu0 %v379
    %649 = vmatpush.bf16.msra.mxu0 %v371
    %650 = vmatpush.bf16.msra.mxu0 %v363
    %651 = vmatpush.bf16.msra.mxu0 %v355
    %652 = vmatpush.bf16.msra.mxu0 %v347
    %653 = vmatpush.bf16.msra.mxu0 %v339
    %654 = vmatpush.bf16.msra.mxu0 %v331
    %655 = vmatmul.bf16.gmra.mxu0 %v64
    %v656 = vpop.f32.mrf.mxu0
    %v657 = vadd.f32 %v553, %v656
    %v658 = vpop.f32.mrf.mxu0
    %659 = vdwg.mxu0
    %v660 = vld [vmem:[#allocation7] sm:$0xff]
    %v662 = vperm.slane %v660, 0
    %v663 = vperm.slane %v660, 1
    %v664 = vperm.slane %v660, 2
    %v665 = vperm.slane %v660, 3
    %v666 = vperm.slane %v660, 4
    %v667 = vperm.slane %v660, 5
    %v668 = vperm.slane %v660, 6
    %v669 = vperm.slane %v660, 7
    %v678 = vmul.f32 %v566, %v662
    %v679 = vmul.f32 %v579, %v663
    %v680 = vmul.f32 %v592, %v664
    %v681 = vmul.f32 %v605, %v665
    %v682 = vmul.f32 %v618, %v666
    %v683 = vmul.f32 %v631, %v667
    %v684 = vmul.f32 %v644, %v668
    %v685 = vmul.f32 %v657, %v669
    %v686 = vmul.f32 %v678, 1.442695
    %v687 = vpow.pop %v686
    %v688 = vmul.f32 %v679, 1.442695
    %v689 = vpow.pop %v688
    %v690 = vmul.f32 %v680, 1.442695
    %v691 = vpow.pop %v690
    %v692 = vmul.f32 %v681, 1.442695
    %v693 = vpow.pop %v692
    %v694 = vmul.f32 %v682, 1.442695
    %v695 = vpow.pop %v694
    %v696 = vmul.f32 %v683, 1.442695
    %v697 = vpow.pop %v696
    %v698 = vmul.f32 %v684, 1.442695
    %v699 = vpow.pop %v698
    %v700 = vmul.f32 %v685, 1.442695
    %v701 = vpow.pop %v700
    %702 = vst [vmem:[#allocation8] sm:$0xff] %v687
    %703 = vst [vmem:[#allocation8 + $0x8] sm:$0xff] %v689
    %704 = vst [vmem:[#allocation8 + $0x10] sm:$0xff] %v691
    %705 = vst [vmem:[#allocation8 + $0x18] sm:$0xff] %v693
    %706 = vst [vmem:[#allocation8 + $0x20] sm:$0xff] %v695
    %707 = vst [vmem:[#allocation8 + $0x28] sm:$0xff] %v697
    %708 = vst [vmem:[#allocation8 + $0x30] sm:$0xff] %v699
    %709 = vst [vmem:[#allocation8 + $0x38] sm:$0xff] %v701
    // Predicated region
    $region26: #{tpu_custom_call.1} parent=1 // pred_check
      _
    $region27: #{tpu_custom_call.1} parent=1 // pred_check_branch
      %711 = sbr.rel (0) target = $region29
    $region28: #{tpu_custom_call.1} parent=1 // pred_region
      %713 = vsyncadd [#allocation4], 0
      %s715 = sshll.u32 [#allocation8], 4
      %s716 = int_to_ptr.vmem [resolvable:$true] %s715
      %s717 = sshll.u32 %s3, 4
      %s718 = int_to_ptr.hbm [resolvable:$true] %s717
      %720 = dma.vmem_to_hbm [thread:$0]  %s716, 1024, %s718, [#allocation4]
    $region29: #{tpu_custom_call.1} parent=1 // pred_fallthru
      _
    // Predicated region
    $region30: #{tpu_custom_call.1} parent=1 // pred_check
      _
    $region31: #{tpu_custom_call.1} parent=1 // pred_check_branch
      %722 = sbr.rel (0) target = $region33
    $region32: #{tpu_custom_call.1} parent=1 // pred_region
      %724 = dma.done [#allocation4], 1024
    $region33: #{tpu_custom_call.1} parent=1 // pred_fallthru
      _
    %725 = vsyncpa [#allocation3], 1
    %726 = vsyncpa [#allocation6], 1
    %727 = vsyncpa [#allocation4], 1

</llo_original>
